<compile_context>
chip_gen: v5e
topology: v5e:2x2
jax: 0.10.0
libtpu: 0.0.40
codegen_flags: <defaults>
</compile_context>

<pallas_src>
import math
import functools

import jax
import jax.numpy as jnp
from jax.experimental import pallas as pl
from jax.experimental.pallas import tpu as pltpu


def _round_up(a: int, b: int) -> int:
    return (a + b - 1) // b * b


def _embedding_kernel(tokens_per_tile: int, scale: float,
                      ids_ref, table_ref, out_ref, gather_buf, sem):
    """One grid step gathers `tokens_per_tile` embedding rows via manual DMA.

    ids_ref    : SMEM (n_padded_tokens,) int32     (scalar-prefetched token ids)
    table_ref  : HBM  (vocab, d_model)             (memory_space=pl.ANY, manual DMA)
    out_ref    : VMEM (tokens_per_tile, d_model)   (auto-pipelined output tile)
    gather_buf : VMEM scratch (tokens_per_tile, d_model)
    sem        : scalar DMA semaphore
    """
    base = pl.program_id(0) * tokens_per_tile

    # Issue all row-gather DMAs for this tile; they are in flight concurrently.
    @pl.loop(0, tokens_per_tile)
    def _(t):
        tok = ids_ref[base + t]
        pltpu.make_async_copy(table_ref.at[tok], gather_buf.at[t], sem).start()

    # Wait for all of them (every copy has the same row shape / byte count).
    @pl.loop(0, tokens_per_tile)
    def _(t):
        pltpu.make_async_copy(table_ref.at[0], gather_buf.at[t], sem).wait()

    out_ref[...] = (gather_buf[...].astype(jnp.float32) * scale).astype(out_ref.dtype)


def input_embeddings(ids, table, *, tokens_per_tile=None):
    """ids: integer array of any shape; table: (vocab_size, d_model) embedding weight.

    Returns an array of shape ids.shape + (d_model,) equal to table[ids] * sqrt(d_model).
    """
    vocab_size, d_model = table.shape
    out_dtype = table.dtype
    scale = math.sqrt(d_model)

    ids_flat = ids.reshape(-1).astype(jnp.int32)
    n_tokens = ids_flat.shape[0]

    # Tile sizing: ~0.5 MiB of gathered rows per grid step (well under the scoped
    # VMEM limit on every generation, including v7x), capped at 256 tokens,
    # sublane-aligned (multiple of 8).
    row_bytes = d_model * jnp.dtype(table.dtype).itemsize
    if tokens_per_tile is None:
        tokens_per_tile = max(8, min(256, (512 * 1024) // max(row_bytes, 1)))
    tokens_per_tile = _round_up(tokens_per_tile, 8)
    tokens_per_tile = min(tokens_per_tile, _round_up(n_tokens, 8))

    n_padded = _round_up(n_tokens, tokens_per_tile)
    if n_padded != n_tokens:
        ids_flat = jnp.pad(ids_flat, (0, n_padded - n_tokens))  # pad with token 0
    num_tiles = n_padded // tokens_per_tile

    kernel = functools.partial(_embedding_kernel, tokens_per_tile, scale)

    grid_spec = pltpu.PrefetchScalarGridSpec(
        num_scalar_prefetch=1,                              # token ids -> SMEM
        grid=(num_tiles,),
        in_specs=[pl.BlockSpec(memory_space=pl.ANY)],       # table stays in HBM
        out_specs=pl.BlockSpec((tokens_per_tile, d_model),  # lane-dense output tile
                               lambda i, ids: (i, 0)),
        scratch_shapes=[
            pltpu.VMEM((tokens_per_tile, d_model), table.dtype),
            pltpu.SemaphoreType.DMA(()),
        ],
    )

    itemsize = jnp.dtype(table.dtype).itemsize
    cost = pl.CostEstimate(
        flops=n_padded * d_model,
        transcendentals=0,
        bytes_accessed=n_padded * 4 + 2 * n_padded * d_model * itemsize,
    )

    out_padded = pl.pallas_call(
        kernel,
        out_shape=jax.ShapeDtypeStruct((n_padded, d_model), out_dtype),
        grid_spec=grid_spec,
        compiler_params=pltpu.CompilerParams(
            dimension_semantics=("parallel",),   # self-contained steps -> megacore-safe
            vmem_limit_bytes=32 * 1024 * 1024,
        ),
        cost_estimate=cost,
    )(ids_flat, table)

    return out_padded[:n_tokens].reshape(*ids.shape, d_model)


if __name__ == "__main__":
    key = jax.random.PRNGKey(0)
    k_ids, k_table = jax.random.split(key)

    batch, seq = 2, 8
    vocab_size, d_model = 64, 128       # small demo; d_model kept a multiple of 128

    ids = jax.random.randint(k_ids, (batch, seq), 0, vocab_size, dtype=jnp.int32)
    # nn.Embedding default init: weights ~ N(0, 1)
    table = jax.random.normal(k_table, (vocab_size, d_model), dtype=jnp.float32)

    out = input_embeddings(ids, table)
    jax.block_until_ready(out)

    # Plain-JAX reference: gather + constant scale (same semantics as the PyTorch module)
    ref = table[ids] * math.sqrt(d_model)
    assert out.shape == (batch, seq, d_model)
    assert jnp.allclose(out, ref, atol=1e-5, rtol=1e-5), "mismatch vs reference"

    print("KERNEL_OK")
</pallas_src>

<mosaic_0001>
module attributes {stable_mosaic.version = 11 : i64} {
  func.func @_embedding_kernel(%arg0: i32, %arg1: memref<16xi32, #tpu.memory_space<smem>>, %arg2: memref<64x128xf32, #tpu.memory_space<any>>, %arg3: memref<16x128xf32, #tpu.memory_space<vmem>>, %arg4: memref<16x128xf32, #tpu.memory_space<vmem>>, %arg5: memref<!tpu.dma_semaphore, #tpu.memory_space<semaphore_mem>>) attributes {dimension_semantics = [#tpu.dimension_semantics<parallel>], iteration_bounds = array<i64: 1>, scalar_prefetch = 1 : i64, scratch_operands = 2 : i64, tpu.core_type = #tpu.core_type<tc>, window_params = [{}, {transform_indices = @transform_1, window_bounds = array<i64: 16, 128>}]} {
    %c16_i32 = arith.constant 16 : i32
    %0 = arith.muli %arg0, %c16_i32 : i32
    %c0_i32 = arith.constant 0 : i32
    %c16_i32_0 = arith.constant 16 : i32
    %1 = arith.addi %c0_i32, %c16_i32_0 : i32
    %c1_i32 = arith.constant 1 : i32
    scf.for %arg6 = %c0_i32 to %1 step %c1_i32  : i32 {
      %c1_i32_9 = arith.constant 1 : i32
      %7 = arith.muli %arg6, %c1_i32_9 : i32
      %c0_i32_10 = arith.constant 0 : i32
      %8 = arith.addi %c0_i32_10, %7 : i32
      %9 = arith.addi %0, %8 : i32
      %10 = arith.index_cast %9 : i32 to index
      %11 = memref.load %arg1[%10] : memref<16xi32, #tpu.memory_space<smem>>
      %c0_i32_11 = arith.constant 0 : i32
      %12 = tpu.memref_slice %arg2[%11, %c0_i32_11] : memref<64x128xf32, #tpu.memory_space<any>> -> memref<1x128xf32, #tpu.memory_space<any>>
      %13 = tpu.memref_squeeze %12 : memref<1x128xf32, #tpu.memory_space<any>> -> memref<128xf32, #tpu.memory_space<any>>
      %c0_i32_12 = arith.constant 0 : i32
      %14 = tpu.memref_slice %arg4[%8, %c0_i32_12] : memref<16x128xf32, #tpu.memory_space<vmem>> -> memref<1x128xf32, #tpu.memory_space<vmem>>
      %15 = tpu.memref_squeeze %14 : memref<1x128xf32, #tpu.memory_space<vmem>> -> memref<128xf32, #tpu.memory_space<vmem>>
      tpu.enqueue_dma source(%13 : memref<128xf32, #tpu.memory_space<any>>) target(%15 : memref<128xf32, #tpu.memory_space<vmem>>) target_semaphore(%arg5 : memref<!tpu.dma_semaphore, #tpu.memory_space<semaphore_mem>>)
    }
    %c16_i32_1 = arith.constant 16 : i32
    %c0_i32_2 = arith.constant 0 : i32
    %c16_i32_3 = arith.constant 16 : i32
    %2 = arith.addi %c0_i32_2, %c16_i32_3 : i32
    %c1_i32_4 = arith.constant 1 : i32
    scf.for %arg6 = %c0_i32_2 to %2 step %c1_i32_4  : i32 {
      %c1_i32_9 = arith.constant 1 : i32
      %7 = arith.muli %arg6, %c1_i32_9 : i32
      %c0_i32_10 = arith.constant 0 : i32
      %8 = arith.addi %c0_i32_10, %7 : i32
      %c0_i32_11 = arith.constant 0 : i32
      %c0_i32_12 = arith.constant 0 : i32
      %9 = tpu.memref_slice %arg2[%c0_i32_11, %c0_i32_12] : memref<64x128xf32, #tpu.memory_space<any>> -> memref<1x128xf32, #tpu.memory_space<any>>
      %10 = tpu.memref_squeeze %9 : memref<1x128xf32, #tpu.memory_space<any>> -> memref<128xf32, #tpu.memory_space<any>>
      %c0_i32_13 = arith.constant 0 : i32
      %11 = tpu.memref_slice %arg4[%8, %c0_i32_13] : memref<16x128xf32, #tpu.memory_space<vmem>> -> memref<1x128xf32, #tpu.memory_space<vmem>>
      %12 = tpu.memref_squeeze %11 : memref<1x128xf32, #tpu.memory_space<vmem>> -> memref<128xf32, #tpu.memory_space<vmem>>
      tpu.wait_dma2 semaphore(%arg5 : memref<!tpu.dma_semaphore, #tpu.memory_space<semaphore_mem>>) src(%10 : memref<128xf32, #tpu.memory_space<any>>) dst(%12 : memref<128xf32, #tpu.memory_space<vmem>>)
    }
    %c16_i32_5 = arith.constant 16 : i32
    %c0 = arith.constant 0 : index
    %c0_6 = arith.constant 0 : index
    %3 = vector.load %arg4[%c0, %c0_6] : memref<16x128xf32, #tpu.memory_space<vmem>>, vector<16x128xf32>
    %cst = arith.constant 11.3137083 : f32
    %4 = vector.broadcast %cst : f32 to vector<16x128xf32>
    %5 = arith.mulf %3, %4 : vector<16x128xf32>
    %c0_7 = arith.constant 0 : index
    %c0_8 = arith.constant 0 : index
    %6 = vector.load %arg3[%c0_7, %c0_8] : memref<16x128xf32, #tpu.memory_space<vmem>>, vector<16x128xf32>
    tpu.vector_store %arg3[%c0_7, %c0_8], %5 {strides = array<i32>} : memref<16x128xf32, #tpu.memory_space<vmem>>, vector<16x128xf32>,
    return
  }
  func.func @transform_1(%arg0: i32, %arg1: memref<16xi32, #tpu.memory_space<smem>>) -> (i32, i32) {
    %c0_i32 = arith.constant 0 : i32
    %c0_i32_0 = arith.constant 0 : i32
    return %arg0, %c0_i32 : i32, i32
  }
}

</mosaic_0001>

<llo_original>
// kernel: tpu_custom_call.1
$region0: #{tpu_custom_call.1}
  #allocation0 [shape = 'u32[]', space=smem, size = 0x4, offset = 0x4, fixed_abs, tag = 'smem constant byte address 0x4 - core index']
  #allocation1 [shape = 'u32[72,128]{1,0:T(1,128)}', space=vmem, size = 0x9000, scoped, tag = 'internal scratch']
  #allocation2 [shape = 'f32[16,128]{1,0:T(8,128)}', space=vmem, size = 0x2000, scoped, tag = 'scratch operand']
  #allocation3 [shape = 's32[1]{0}', space=sflag, size = 0x4, scoped, tag = 'scratch operand']
  #allocation4 [shape = 's32[1]{0}', space=sflag, size = 0x4, scoped, tag = 'scoped memory for tpu_custom_call.1']
  #allocation5 [shape = 'u8[512]{0}', space=smem, size = 0x200, scoped, tag = 'prefetched SMEM operand 0']
  #allocation8 [shape = 's32[]', space=sflag, size = 0x4, offset = 0, fixed_abs, tag = 'sflag constant byte address 0x0 - dummy sync flag']
  #allocation9 [shape = 's32[]', space=sflag, size = 0x4, offset = 0, fixed_abs, tag = 'sflag constant byte address 0x0 - dummy sync flag']
  #allocation10 [shape = 'u32[]', space=smem, size = 0x4, offset = 0x44, fixed_abs, tag = 'smem constant byte address 0x44 - assertion arg 0']
  #allocation11 [shape = 'u32[]', space=smem, size = 0x4, offset = 0x48, fixed_abs, tag = 'smem constant byte address 0x48 - assertion arg 1']
  %s0 = inlined_call_operand.hbm [shape: s32[16], index: 0, kind: input, shape index: {}]
  %s1 = inlined_call_operand.hbm [shape: f32[64,128], index: 1, kind: input, shape index: {}]
  %s2 = inlined_call_operand.hbm [shape: f32[16,128], index: 2, kind: output, shape index: {}]
  %s3 = sld [smem:[#allocation0]]
  $region28: #{tpu_custom_call.1} parent=0
    _
  %s5 = ssub.s32 1, %s3
  %s6 = scalar_select 0, %s5, %s3
  %s8 = sshll.u32 %s0, 4
  %s9 = int_to_ptr.hbm [resolvable:$true] %s8
  %11 = dma.hbm_to_smem %s9, 16, [#allocation5], [#allocation4]
  %13 = dma.done [#allocation4], 16
  %14 = sfence
  $region1: #{tpu_custom_call.1} parent=0
    #allocation6 [shape = 'u8[8192]{0}', space=vmem, size = 0x2000, scoped, tag = 'output window, operand 0, single buffered']
    #allocation7 [shape = 's32[1]{0}', space=sflag, size = 0x4, scoped, tag = 'scoped memory for tpu_custom_call.1']
    %15 = vsyncpa [#allocation7], 0
    %s16 = smul.u32 0, 16
    loop: start=0, step=1, limit=16
    $region2: #{tpu_custom_call.1} parent=1 // loop_pre_header
      _
    $region3: #{tpu_custom_call.1} parent=1 // loop_header
      %s18 = sphi 0, %s22
      %p19 = scmp.ge.s32.totalorder %s18, 16
    $region4: #{tpu_custom_call.1} parent=1 // loop_header_branch
      %21 = sbr.rel (%p19) target = $region8
    $region5: #{tpu_custom_call.1} parent=1 // loop_body
      %s23 = sadd.s32 %s16, %s18
      %s24 = sld [smem:[#allocation5 + %s23]]
      %s25 = scalar_lea.hbm %s1, %s24
      %s26 = scalar_lea.vmem [#allocation2], %s18
      // Predicated region
      $region9: #{tpu_custom_call.1} parent=5 // pred_check
        _
      $region10: #{tpu_custom_call.1} parent=5 // pred_check_branch
        %28 = sbr.rel target = $region12
      $region11: #{tpu_custom_call.1} parent=5 // pred_region
        %29 = sst [smem:[#allocation10]] [#allocation9]
        %30 = sst [smem:[#allocation11]] [#allocation8]
      $region12: #{tpu_custom_call.1} parent=5 // pred_fallthru
        _
      %32 = shalt.err (0)
      %s34 = sshll.u32 %s25, 4
      %s35 = int_to_ptr.hbm [resolvable:$true] %s34
      %s36 = sshll.u32 %s26, 4
      %s37 = int_to_ptr.vmem [resolvable:$true] %s36
      %39 = dma.hbm_to_vmem [thread:$0]  %s35, 16, %s37, [#allocation3]
    $region6: #{tpu_custom_call.1} parent=1 // loop_footer
      %s22 = sadd.s32 1, %s18
    $region7: #{tpu_custom_call.1} parent=1 // loop_footer_branch
      %17 = sbr.rel target = $region3
    $region8: #{tpu_custom_call.1} parent=1 // loop_exit
      _
    loop: start=0, step=1, limit=16
    $region13: #{tpu_custom_call.1} parent=1 // loop_pre_header
      _
    $region14: #{tpu_custom_call.1} parent=1 // loop_header
      %s41 = sphi 0, %s45
      %p42 = scmp.ge.s32.totalorder %s41, 16
    $region15: #{tpu_custom_call.1} parent=1 // loop_header_branch
      %44 = sbr.rel (%p42) target = $region19
    $region16: #{tpu_custom_call.1} parent=1 // loop_body
      %47 = dma.done [#allocation3], 16
    $region17: #{tpu_custom_call.1} parent=1 // loop_footer
      %s45 = sadd.s32 1, %s41
    $region18: #{tpu_custom_call.1} parent=1 // loop_footer_branch
      %40 = sbr.rel target = $region14
    $region19: #{tpu_custom_call.1} parent=1 // loop_exit
      _
    %v48 = vld [vmem:[#allocation2] sm:$0xff]
    %v49 = vld [vmem:[#allocation2 + $0x8] sm:$0xff]
    %v50 = vmul.f32 %v48, 11.313708
    %v51 = vmul.f32 %v49, 11.313708
    %52 = vst [vmem:[#allocation6] sm:$0xff] %v50
    %53 = vst [vmem:[#allocation6 + $0x8] sm:$0xff] %v51
    // Predicated region
    $region20: #{tpu_custom_call.1} parent=1 // pred_check
      _
    $region21: #{tpu_custom_call.1} parent=1 // pred_check_branch
      %55 = sbr.rel (0) target = $region23
    $region22: #{tpu_custom_call.1} parent=1 // pred_region
      %57 = vsyncadd [#allocation7], 0
      %s58 = sshll.u32 [#allocation6], 4
      %s59 = int_to_ptr.vmem [resolvable:$true] %s58
      %s60 = sshll.u32 %s2, 4
      %s61 = int_to_ptr.hbm [resolvable:$true] %s60
      %66 = dma.vmem_to_hbm [thread:$0]  %s59, 256, %s61, [#allocation7], 128, 128, 8
    $region23: #{tpu_custom_call.1} parent=1 // pred_fallthru
      _
    // Predicated region
    $region24: #{tpu_custom_call.1} parent=1 // pred_check
      _
    $region25: #{tpu_custom_call.1} parent=1 // pred_check_branch
      %68 = sbr.rel (0) target = $region27
    $region26: #{tpu_custom_call.1} parent=1 // pred_region
      %70 = dma.done [#allocation7], 256
    $region27: #{tpu_custom_call.1} parent=1 // pred_fallthru
      _
    %71 = vsyncpa [#allocation7], 1
  %72 = vsyncmov [#allocation3]
  %s73 = vpop.sfrf %72
  %p74 = scmp.eq.s32.totalorder %s73, 0
  %p75 = pneg %p74
  %77 = shalt.err (%p75)

</llo_original>
